<compile_context>
chip_gen: v5e
topology: v5e:2x2
jax: 0.10.0
libtpu: 0.0.40
codegen_flags: <defaults>
</compile_context>

<pallas_src>
import functools

import jax
import jax.numpy as jnp
from jax.experimental import pallas as pl
from jax.experimental.pallas import tpu as pltpu

LANE = 128
SUBLANE = 8


def _round_up(n, m):
    return (n + m - 1) // m * m


def mlp_kernel(num_inputs, num_layers, *refs):
    """Fused (concat + MLP) forward for one batch tile.

    refs layout:
      refs[0:num_inputs]                x_j activation tiles   [TB, f_j]
      refs[num_inputs : 2*num_inputs]   first-layer W splits   [f_j, H]
      refs[2*num_inputs]                first-layer bias       [1, H]
      then (W_i [in, out], b_i [1, out]) for layers 2..num_layers
      refs[-1]                          out_ref                [TB, OUT_PAD]
    """
    out_ref = refs[-1]
    x_refs = refs[:num_inputs]
    p = refs[num_inputs:-1]

    # Layer 1: torch.cat fused as a sum of partial matmuls over the splits.
    h = jnp.dot(x_refs[0][...], p[0][...], preferred_element_type=jnp.float32)
    for j in range(1, num_inputs):
        h = h + jnp.dot(x_refs[j][...], p[j][...],
                        preferred_element_type=jnp.float32)
    h = h + p[num_inputs][...]
    if num_layers > 1:
        h = jnp.maximum(h, 0.0)  # layer 1 is a hidden layer -> ReLU

    # Remaining layers (ReLU on hidden layers only, none on the output layer).
    idx = num_inputs + 1
    for i in range(1, num_layers):
        w = p[idx][...]
        b = p[idx + 1][...]
        idx += 2
        h = jnp.dot(h, w, preferred_element_type=jnp.float32) + b
        if i < num_layers - 1:
            h = jnp.maximum(h, 0.0)

    out_ref[...] = h.astype(out_ref.dtype)


def prepare_params(params, feat_splits):
    """One-time parameter preparation (NOT per forward call):
      * cast everything to f32,
      * split the first-layer weight along its input axis per feature group
        (this is what lets the kernel fuse torch.cat),
      * zero-pad the final layer to a lane-dense (multiple of 128) output width.
    Returns (flat list of param arrays, out_features, padded_out_features).
    """
    (w0, b0) = params[0]
    rest = params[1:]

    flat = []
    off = 0
    for f in feat_splits:
        flat.append(jnp.asarray(w0[off:off + f, :], jnp.float32))
        off += f
    assert off == w0.shape[0], "feat_splits must sum to in_features"
    flat.append(jnp.asarray(b0, jnp.float32).reshape(1, -1))

    out_features = params[-1][0].shape[1]
    out_pad = _round_up(out_features, LANE)
    for li, (w, b) in enumerate(rest):
        w = jnp.asarray(w, jnp.float32)
        b = jnp.asarray(b, jnp.float32).reshape(1, -1)
        if li == len(rest) - 1 and out_pad != out_features:
            w = jnp.pad(w, ((0, 0), (0, out_pad - out_features)))
            b = jnp.pad(b, ((0, 0), (0, out_pad - out_features)))
        flat.append(w)
        flat.append(b)
    return flat, out_features, out_pad


def make_scalars_model_forward(params, feat_splits, batch, batch_tile=512):
    """Builds a jitted forward with prepared parameters baked in via closure."""
    flat_params, out_features, out_pad = prepare_params(params, feat_splits)
    num_inputs = len(feat_splits)
    num_layers = len(params)
    kernel = functools.partial(mlp_kernel, num_inputs, num_layers)

    # Batch tiling: sublane-aligned tile, 1-D "parallel" grid (megacore on v7x).
    tb = min(_round_up(batch, SUBLANE), batch_tile)
    padded_batch = _round_up(batch, tb)
    n_tiles = padded_batch // tb

    # Advisory cost estimate so XLA can schedule around the custom call.
    hidden = flat_params[0].shape[1]
    flops = 2 * padded_batch * sum(feat_splits) * hidden
    idx = num_inputs + 1
    for _ in range(1, num_layers):
        w = flat_params[idx]
        flops += 2 * padded_batch * w.shape[0] * w.shape[1]
        idx += 2
    bytes_accessed = (
        sum(padded_batch * f * 4 for f in feat_splits)
        + sum(int(a.size) * 4 for a in flat_params)
        + padded_batch * out_pad * 4
    )
    cost = pl.CostEstimate(
        flops=flops, transcendentals=0, bytes_accessed=bytes_accessed
    )

    # Activation tiles stream along the batch grid; weights use a full-array
    # block with a constant index_map so they remain VMEM-resident.
    x_specs = [pl.BlockSpec((tb, f), lambda i: (i, 0)) for f in feat_splits]
    w_specs = [pl.BlockSpec(a.shape, lambda i: (0, 0)) for a in flat_params]
    out_spec = pl.BlockSpec((tb, out_pad), lambda i: (i, 0))

    call = pl.pallas_call(
        kernel,
        out_shape=jax.ShapeDtypeStruct((padded_batch, out_pad), jnp.float32),
        grid=(n_tiles,),
        in_specs=x_specs + w_specs,
        out_specs=out_spec,
        compiler_params=pltpu.CompilerParams(
            dimension_semantics=("parallel",)),
        cost_estimate=cost,
    )

    @jax.jit
    def forward(*xs):
        xs = [x.astype(jnp.float32) for x in xs]
        if padded_batch != batch:
            xs = [jnp.pad(x, ((0, padded_batch - batch), (0, 0))) for x in xs]
        out_padded = call(*xs, *flat_params)
        return out_padded[:batch, :out_features]  # drop batch/lane padding

    return forward


def init_params(key, in_features, hidden_layer_size, hidden_layer_num, out_features):
    """Deterministic synthetic parameters matching the torch module's shapes.
    Weights stored as [in, out] (transpose of nn.Linear), biases as [1, out]."""
    params = []
    dims_in = [in_features] + [hidden_layer_size] * (hidden_layer_num - 1)
    dims_out = [hidden_layer_size] * hidden_layer_num
    for din, dout in zip(dims_in, dims_out):
        key, kw, kb = jax.random.split(key, 3)
        w = jax.random.normal(kw, (din, dout), jnp.float32) * (1.0 / jnp.sqrt(din))
        b = jax.random.normal(kb, (1, dout), jnp.float32) * 0.01
        params.append((w, b))
    key, kw, kb = jax.random.split(key, 3)
    w = jax.random.normal(kw, (hidden_layer_size, out_features), jnp.float32) * (
        1.0 / jnp.sqrt(hidden_layer_size)
    )
    b = jax.random.normal(kb, (1, out_features), jnp.float32) * 0.01
    params.append((w, b))
    return params


def reference_forward(xs, params):
    """Pure-JAX reference (explicit concat) for correctness checking."""
    h = jnp.concatenate(xs, axis=1).astype(jnp.float32)
    n = len(params)
    for i, (w, b) in enumerate(params):
        h = h @ w + b
        if i < n - 1:
            h = jnp.maximum(h, 0.0)
    return h


if __name__ == "__main__":
    # Small shapes: two "scalar" feature groups concatenated along dim=1.
    B = 8
    feat_splits = (12, 20)            # -> in_features = 32 after concat
    in_features = sum(feat_splits)
    hidden_layer_size = 32
    hidden_layer_num = 2
    out_features = 4

    key = jax.random.PRNGKey(0)
    k_x0, k_x1, k_p = jax.random.split(key, 3)
    xs = [
        jax.random.normal(k_x0, (B, feat_splits[0]), jnp.float32),
        jax.random.normal(k_x1, (B, feat_splits[1]), jnp.float32),
    ]
    params = init_params(
        k_p, in_features, hidden_layer_size, hidden_layer_num, out_features
    )

    forward = make_scalars_model_forward(params, feat_splits, B)
    out = jax.block_until_ready(forward(*xs))

    ref = reference_forward(xs, params)
    assert out.shape == (B, out_features)
    assert jnp.allclose(out, ref, atol=1e-4, rtol=1e-4), "mismatch vs reference"

    print("KERNEL_OK")
</pallas_src>

<mosaic_0001>
module attributes {stable_mosaic.version = 11 : i64} {
  func.func @mlp_kernel(%arg0: i32, %arg1: memref<8x12xf32, #tpu.memory_space<vmem>>, %arg2: memref<8x20xf32, #tpu.memory_space<vmem>>, %arg3: memref<12x32xf32, #tpu.memory_space<vmem>>, %arg4: memref<20x32xf32, #tpu.memory_space<vmem>>, %arg5: memref<1x32xf32, #tpu.memory_space<vmem>>, %arg6: memref<32x32xf32, #tpu.memory_space<vmem>>, %arg7: memref<1x32xf32, #tpu.memory_space<vmem>>, %arg8: memref<32x128xf32, #tpu.memory_space<vmem>>, %arg9: memref<1x128xf32, #tpu.memory_space<vmem>>, %arg10: memref<8x128xf32, #tpu.memory_space<vmem>>) attributes {dimension_semantics = [#tpu.dimension_semantics<parallel>], iteration_bounds = array<i64: 1>, scalar_prefetch = 0 : i64, scratch_operands = 0 : i64, tpu.core_type = #tpu.core_type<tc>, window_params = [{transform_indices = @transform_0, window_bounds = array<i64: 8, 12>}, {transform_indices = @transform_1, window_bounds = array<i64: 8, 20>}, {pipeline_mode = #tpu.pipeline_mode<synchronous>, transform_indices = @transform_2, window_bounds = array<i64: 12, 32>}, {pipeline_mode = #tpu.pipeline_mode<synchronous>, transform_indices = @transform_3, window_bounds = array<i64: 20, 32>}, {pipeline_mode = #tpu.pipeline_mode<synchronous>, transform_indices = @transform_4, window_bounds = array<i64: 1, 32>}, {pipeline_mode = #tpu.pipeline_mode<synchronous>, transform_indices = @transform_5, window_bounds = array<i64: 32, 32>}, {pipeline_mode = #tpu.pipeline_mode<synchronous>, transform_indices = @transform_6, window_bounds = array<i64: 1, 32>}, {pipeline_mode = #tpu.pipeline_mode<synchronous>, transform_indices = @transform_7, window_bounds = array<i64: 32, 128>}, {pipeline_mode = #tpu.pipeline_mode<synchronous>, transform_indices = @transform_8, window_bounds = array<i64: 1, 128>}, {transform_indices = @transform_9, window_bounds = array<i64: 8, 128>}]} {
    %c0 = arith.constant 0 : index
    %c0_0 = arith.constant 0 : index
    %0 = vector.load %arg1[%c0, %c0_0] : memref<8x12xf32, #tpu.memory_space<vmem>>, vector<8x12xf32>
    %c0_1 = arith.constant 0 : index
    %c0_2 = arith.constant 0 : index
    %1 = vector.load %arg3[%c0_1, %c0_2] : memref<12x32xf32, #tpu.memory_space<vmem>>, vector<12x32xf32>
    %cst = arith.constant dense<0.000000e+00> : vector<8x32xf32>
    %2 = tpu.matmul %0, %1, %cst {dimension_numbers = #tpu.dot_dimension_numbers<[1], [0], [0], [1], [0, 0, 1, 1], [], []>} : vector<8x12xf32>, vector<12x32xf32>, vector<8x32xf32> -> vector<8x32xf32>
    %c0_3 = arith.constant 0 : index
    %c0_4 = arith.constant 0 : index
    %3 = vector.load %arg2[%c0_3, %c0_4] : memref<8x20xf32, #tpu.memory_space<vmem>>, vector<8x20xf32>
    %c0_5 = arith.constant 0 : index
    %c0_6 = arith.constant 0 : index
    %4 = vector.load %arg4[%c0_5, %c0_6] : memref<20x32xf32, #tpu.memory_space<vmem>>, vector<20x32xf32>
    %cst_7 = arith.constant dense<0.000000e+00> : vector<8x32xf32>
    %5 = tpu.matmul %3, %4, %cst_7 {dimension_numbers = #tpu.dot_dimension_numbers<[1], [0], [0], [1], [0, 0, 1, 1], [], []>} : vector<8x20xf32>, vector<20x32xf32>, vector<8x32xf32> -> vector<8x32xf32>
    %6 = arith.addf %2, %5 : vector<8x32xf32>
    %c0_8 = arith.constant 0 : index
    %c0_9 = arith.constant 0 : index
    %7 = vector.load %arg5[%c0_8, %c0_9] : memref<1x32xf32, #tpu.memory_space<vmem>>, vector<1x32xf32>
    %8 = vector.broadcast %7 : vector<1x32xf32> to vector<8x32xf32>
    %9 = arith.addf %6, %8 : vector<8x32xf32>
    %cst_10 = arith.constant 0.000000e+00 : f32
    %10 = vector.broadcast %cst_10 : f32 to vector<8x32xf32>
    %11 = arith.maximumf %9, %10 : vector<8x32xf32>
    %c0_11 = arith.constant 0 : index
    %c0_12 = arith.constant 0 : index
    %12 = vector.load %arg6[%c0_11, %c0_12] : memref<32x32xf32, #tpu.memory_space<vmem>>, vector<32x32xf32>
    %c0_13 = arith.constant 0 : index
    %c0_14 = arith.constant 0 : index
    %13 = vector.load %arg7[%c0_13, %c0_14] : memref<1x32xf32, #tpu.memory_space<vmem>>, vector<1x32xf32>
    %cst_15 = arith.constant dense<0.000000e+00> : vector<8x32xf32>
    %14 = tpu.matmul %11, %12, %cst_15 {dimension_numbers = #tpu.dot_dimension_numbers<[1], [0], [0], [1], [0, 0, 1, 1], [], []>} : vector<8x32xf32>, vector<32x32xf32>, vector<8x32xf32> -> vector<8x32xf32>
    %15 = vector.broadcast %13 : vector<1x32xf32> to vector<8x32xf32>
    %16 = arith.addf %14, %15 : vector<8x32xf32>
    %cst_16 = arith.constant 0.000000e+00 : f32
    %17 = vector.broadcast %cst_16 : f32 to vector<8x32xf32>
    %18 = arith.maximumf %16, %17 : vector<8x32xf32>
    %c0_17 = arith.constant 0 : index
    %c0_18 = arith.constant 0 : index
    %19 = vector.load %arg8[%c0_17, %c0_18] : memref<32x128xf32, #tpu.memory_space<vmem>>, vector<32x128xf32>
    %c0_19 = arith.constant 0 : index
    %c0_20 = arith.constant 0 : index
    %20 = vector.load %arg9[%c0_19, %c0_20] : memref<1x128xf32, #tpu.memory_space<vmem>>, vector<1x128xf32>
    %cst_21 = arith.constant dense<0.000000e+00> : vector<8x128xf32>
    %21 = tpu.matmul %18, %19, %cst_21 {dimension_numbers = #tpu.dot_dimension_numbers<[1], [0], [0], [1], [0, 0, 1, 1], [], []>} : vector<8x32xf32>, vector<32x128xf32>, vector<8x128xf32> -> vector<8x128xf32>
    %22 = vector.broadcast %20 : vector<1x128xf32> to vector<8x128xf32>
    %23 = arith.addf %21, %22 : vector<8x128xf32>
    %c0_22 = arith.constant 0 : index
    %c0_23 = arith.constant 0 : index
    %24 = vector.load %arg10[%c0_22, %c0_23] : memref<8x128xf32, #tpu.memory_space<vmem>>, vector<8x128xf32>
    tpu.vector_store %arg10[%c0_22, %c0_23], %23 {strides = array<i32>} : memref<8x128xf32, #tpu.memory_space<vmem>>, vector<8x128xf32>,
    return
  }
  func.func @transform_0(%arg0: i32) -> (i32, i32) {
    %c0_i32 = arith.constant 0 : i32
    %c0_i32_0 = arith.constant 0 : i32
    return %arg0, %c0_i32 : i32, i32
  }
  func.func @transform_1(%arg0: i32) -> (i32, i32) {
    %c0_i32 = arith.constant 0 : i32
    %c0_i32_0 = arith.constant 0 : i32
    return %arg0, %c0_i32 : i32, i32
  }
  func.func @transform_2(%arg0: i32) -> (i32, i32) {
    %c0_i32 = arith.constant 0 : i32
    %c0_i32_0 = arith.constant 0 : i32
    %c0_i32_1 = arith.constant 0 : i32
    return %c0_i32, %c0_i32_0 : i32, i32
  }
  func.func @transform_3(%arg0: i32) -> (i32, i32) {
    %c0_i32 = arith.constant 0 : i32
    %c0_i32_0 = arith.constant 0 : i32
    %c0_i32_1 = arith.constant 0 : i32
    return %c0_i32, %c0_i32_0 : i32, i32
  }
  func.func @transform_4(%arg0: i32) -> (i32, i32) {
    %c0_i32 = arith.constant 0 : i32
    %c0_i32_0 = arith.constant 0 : i32
    %c0_i32_1 = arith.constant 0 : i32
    return %c0_i32, %c0_i32_0 : i32, i32
  }
  func.func @transform_5(%arg0: i32) -> (i32, i32) {
    %c0_i32 = arith.constant 0 : i32
    %c0_i32_0 = arith.constant 0 : i32
    %c0_i32_1 = arith.constant 0 : i32
    return %c0_i32, %c0_i32_0 : i32, i32
  }
  func.func @transform_6(%arg0: i32) -> (i32, i32) {
    %c0_i32 = arith.constant 0 : i32
    %c0_i32_0 = arith.constant 0 : i32
    %c0_i32_1 = arith.constant 0 : i32
    return %c0_i32, %c0_i32_0 : i32, i32
  }
  func.func @transform_7(%arg0: i32) -> (i32, i32) {
    %c0_i32 = arith.constant 0 : i32
    %c0_i32_0 = arith.constant 0 : i32
    %c0_i32_1 = arith.constant 0 : i32
    return %c0_i32, %c0_i32_0 : i32, i32
  }
  func.func @transform_8(%arg0: i32) -> (i32, i32) {
    %c0_i32 = arith.constant 0 : i32
    %c0_i32_0 = arith.constant 0 : i32
    %c0_i32_1 = arith.constant 0 : i32
    return %c0_i32, %c0_i32_0 : i32, i32
  }
  func.func @transform_9(%arg0: i32) -> (i32, i32) {
    %c0_i32 = arith.constant 0 : i32
    %c0_i32_0 = arith.constant 0 : i32
    return %arg0, %c0_i32 : i32, i32
  }
}

</mosaic_0001>

<llo_original>
// kernel: forward.1
$region0: #{forward.1}
  #allocation0 [shape = 'u32[]', space=smem, size = 0x4, offset = 0x4, fixed_abs, tag = 'smem constant byte address 0x4 - core index']
  #allocation1 [shape = 'u32[72,128]{1,0:T(1,128)}', space=vmem, size = 0x9000, scoped, tag = 'internal scratch']
  %s0 = inlined_call_operand.hbm [shape: f32[8,12], index: 0, kind: input, shape index: {}]
  %s1 = inlined_call_operand.hbm [shape: f32[8,20], index: 1, kind: input, shape index: {}]
  %s2 = inlined_call_operand.hbm [shape: f32[12,32], index: 2, kind: input, shape index: {}]
  %s3 = inlined_call_operand.hbm [shape: f32[20,32], index: 3, kind: input, shape index: {}]
  %s4 = inlined_call_operand.vmem [shape: f32[1,32], index: 4, kind: input, shape index: {}]
  %s5 = inlined_call_operand.hbm [shape: f32[32,32], index: 5, kind: input, shape index: {}]
  %s6 = inlined_call_operand.vmem [shape: f32[1,32], index: 6, kind: input, shape index: {}]
  %s7 = inlined_call_operand.hbm [shape: f32[32,128], index: 7, kind: input, shape index: {}]
  %s8 = inlined_call_operand.vmem [shape: f32[1,128], index: 8, kind: input, shape index: {}]
  %s9 = inlined_call_operand.vmem [shape: f32[8,128], index: 9, kind: output, shape index: {}]
  %s10 = sld [smem:[#allocation0]]
  $region70: #{forward.1} parent=0
    _
  %s12 = ssub.s32 1, %s10
  %s13 = scalar_select 0, %s12, %s10
  $region1: #{forward.1} parent=0
    #allocation2 [shape = 'u8[4096]{0}', space=vmem, size = 0x1000, scoped, tag = 'input window, operand 0, single buffered']
    #allocation3 [shape = 's32[1]{0}', space=sflag, size = 0x4, scoped, tag = 'scoped memory for forward.1']
    #allocation4 [shape = 'u8[4096]{0}', space=vmem, size = 0x1000, scoped, tag = 'input window, operand 1, single buffered']
    #allocation5 [shape = 's32[1]{0}', space=sflag, size = 0x4, scoped, tag = 'scoped memory for forward.1']
    #allocation6 [shape = 'u8[8192]{0}', space=vmem, size = 0x2000, scoped, tag = 'input window, operand 2, single buffered']
    #allocation7 [shape = 'u8[12288]{0}', space=vmem, size = 0x3000, scoped, tag = 'input window, operand 3, single buffered']
    #allocation8 [shape = 's32[1]{0}', space=sflag, size = 0x4, scoped, tag = 'scoped memory for forward.1']
    #allocation9 [shape = 'u8[16384]{0}', space=vmem, size = 0x4000, scoped, tag = 'input window, operand 5, single buffered']
    #allocation10 [shape = 'u8[16384]{0}', space=vmem, size = 0x4000, scoped, tag = 'input window, operand 7, single buffered']
    #allocation11 [shape = 's32[1]{0}', space=sflag, size = 0x4, scoped, tag = 'scoped memory for forward.1']
    %14 = vsyncpa [#allocation3], 0
    %15 = vsyncpa [#allocation5], 0
    %16 = vsyncpa [#allocation8], 0
    %17 = vsyncpa [#allocation11], 0
    // Predicated region
    $region2: #{forward.1} parent=1 // pred_check
      _
    $region3: #{forward.1} parent=1 // pred_check_branch
      %19 = sbr.rel (0) target = $region5
    $region4: #{forward.1} parent=1 // pred_region
      %21 = vsyncadd [#allocation3], 0
      %s23 = sshll.u32 %s0, 4
      %s24 = int_to_ptr.hbm [resolvable:$true] %s23
      %s25 = sshll.u32 [#allocation2], 4
      %s26 = int_to_ptr.vmem [resolvable:$true] %s25
      %28 = dma.hbm_to_vmem [thread:$0]  %s24, 128, %s26, [#allocation3]
    $region5: #{forward.1} parent=1 // pred_fallthru
      _
    // Predicated region
    $region6: #{forward.1} parent=1 // pred_check
      _
    $region7: #{forward.1} parent=1 // pred_check_branch
      %30 = sbr.rel (0) target = $region9
    $region8: #{forward.1} parent=1 // pred_region
      %32 = vsyncadd [#allocation5], 0
      %s34 = sshll.u32 %s1, 4
      %s35 = int_to_ptr.hbm [resolvable:$true] %s34
      %s36 = sshll.u32 [#allocation4], 4
      %s37 = int_to_ptr.vmem [resolvable:$true] %s36
      %39 = dma.hbm_to_vmem [thread:$0]  %s35, 128, %s37, [#allocation5]
    $region9: #{forward.1} parent=1 // pred_fallthru
      _
    // Predicated region
    $region10: #{forward.1} parent=1 // pred_check
      _
    $region11: #{forward.1} parent=1 // pred_check_branch
      %41 = sbr.rel (0) target = $region13
    $region12: #{forward.1} parent=1 // pred_region
      %43 = vsyncadd [#allocation5], 0
      %s44 = sshll.u32 %s2, 4
      %s45 = int_to_ptr.hbm [resolvable:$true] %s44
      %s46 = sshll.u32 [#allocation6], 4
      %s47 = int_to_ptr.vmem [resolvable:$true] %s46
      %52 = dma.hbm_to_vmem [thread:$0]  %s45, 256, %s47, [#allocation5], 128, 128, 8
    $region13: #{forward.1} parent=1 // pred_fallthru
      _
    // Predicated region
    $region14: #{forward.1} parent=1 // pred_check
      _
    $region15: #{forward.1} parent=1 // pred_check_branch
      %54 = sbr.rel (0) target = $region17
    $region16: #{forward.1} parent=1 // pred_region
      %56 = vsyncadd [#allocation8], 0
      %s57 = sshll.u32 %s3, 4
      %s58 = int_to_ptr.hbm [resolvable:$true] %s57
      %s59 = sshll.u32 [#allocation7], 4
      %s60 = int_to_ptr.vmem [resolvable:$true] %s59
      %65 = dma.hbm_to_vmem [thread:$0]  %s58, 384, %s60, [#allocation8], 128, 128, 8
    $region17: #{forward.1} parent=1 // pred_fallthru
      _
    // Predicated region
    $region18: #{forward.1} parent=1 // pred_check
      _
    $region19: #{forward.1} parent=1 // pred_check_branch
      %67 = sbr.rel (0) target = $region21
    $region20: #{forward.1} parent=1 // pred_region
      _
    $region21: #{forward.1} parent=1 // pred_fallthru
      _
    // Predicated region
    $region22: #{forward.1} parent=1 // pred_check
      _
    $region23: #{forward.1} parent=1 // pred_check_branch
      %69 = sbr.rel (0) target = $region25
    $region24: #{forward.1} parent=1 // pred_region
      %71 = vsyncadd [#allocation8], 0
      %s72 = sshll.u32 %s5, 4
      %s73 = int_to_ptr.hbm [resolvable:$true] %s72
      %s74 = sshll.u32 [#allocation9], 4
      %s75 = int_to_ptr.vmem [resolvable:$true] %s74
      %80 = dma.hbm_to_vmem [thread:$0]  %s73, 512, %s75, [#allocation8], 128, 128, 8
    $region25: #{forward.1} parent=1 // pred_fallthru
      _
    // Predicated region
    $region26: #{forward.1} parent=1 // pred_check
      _
    $region27: #{forward.1} parent=1 // pred_check_branch
      %82 = sbr.rel (0) target = $region29
    $region28: #{forward.1} parent=1 // pred_region
      _
    $region29: #{forward.1} parent=1 // pred_fallthru
      _
    // Predicated region
    $region30: #{forward.1} parent=1 // pred_check
      _
    $region31: #{forward.1} parent=1 // pred_check_branch
      %84 = sbr.rel (0) target = $region33
    $region32: #{forward.1} parent=1 // pred_region
      %86 = vsyncadd [#allocation11], 0
      %s87 = sshll.u32 %s7, 4
      %s88 = int_to_ptr.hbm [resolvable:$true] %s87
      %s89 = sshll.u32 [#allocation10], 4
      %s90 = int_to_ptr.vmem [resolvable:$true] %s89
      %95 = dma.hbm_to_vmem [thread:$0]  %s88, 512, %s90, [#allocation11], 128, 128, 8
    $region33: #{forward.1} parent=1 // pred_fallthru
      _
    // Predicated region
    $region34: #{forward.1} parent=1 // pred_check
      _
    $region35: #{forward.1} parent=1 // pred_check_branch
      %97 = sbr.rel (0) target = $region37
    $region36: #{forward.1} parent=1 // pred_region
      _
    $region37: #{forward.1} parent=1 // pred_fallthru
      _
    // Predicated region
    $region38: #{forward.1} parent=1 // pred_check
      _
    $region39: #{forward.1} parent=1 // pred_check_branch
      %99 = sbr.rel (0) target = $region41
    $region40: #{forward.1} parent=1 // pred_region
      %101 = dma.done [#allocation3], 128
    $region41: #{forward.1} parent=1 // pred_fallthru
      _
    // Predicated region
    $region42: #{forward.1} parent=1 // pred_check
      _
    $region43: #{forward.1} parent=1 // pred_check_branch
      %103 = sbr.rel (0) target = $region45
    $region44: #{forward.1} parent=1 // pred_region
      %105 = dma.done [#allocation5], 128
    $region45: #{forward.1} parent=1 // pred_fallthru
      _
    // Predicated region
    $region46: #{forward.1} parent=1 // pred_check
      _
    $region47: #{forward.1} parent=1 // pred_check_branch
      %107 = sbr.rel (0) target = $region49
    $region48: #{forward.1} parent=1 // pred_region
      %109 = dma.done [#allocation5], 256
    $region49: #{forward.1} parent=1 // pred_fallthru
      _
    // Predicated region
    $region50: #{forward.1} parent=1 // pred_check
      _
    $region51: #{forward.1} parent=1 // pred_check_branch
      %111 = sbr.rel (0) target = $region53
    $region52: #{forward.1} parent=1 // pred_region
      %113 = dma.done [#allocation8], 384
    $region53: #{forward.1} parent=1 // pred_fallthru
      _
    // Predicated region
    $region54: #{forward.1} parent=1 // pred_check
      _
    $region55: #{forward.1} parent=1 // pred_check_branch
      %115 = sbr.rel (0) target = $region57
    $region56: #{forward.1} parent=1 // pred_region
      %117 = dma.done [#allocation8], 512
    $region57: #{forward.1} parent=1 // pred_fallthru
      _
    // Predicated region
    $region58: #{forward.1} parent=1 // pred_check
      _
    $region59: #{forward.1} parent=1 // pred_check_branch
      %119 = sbr.rel (0) target = $region61
    $region60: #{forward.1} parent=1 // pred_region
      %121 = dma.done [#allocation11], 512
    $region61: #{forward.1} parent=1 // pred_fallthru
      _
    %v122 = vld [vmem:[#allocation2] sm:$0xff]
    %v123 = vld [vmem:[#allocation6] sm:$0xff]
    %v124 = vld [vmem:[#allocation6 + $0x8] sm:$0xf]
    %v125 = vld [vmem:[#allocation4] sm:$0xff]
    %v126 = vld [vmem:[#allocation7] sm:$0xff]
    %v127 = vld [vmem:[#allocation7 + $0x8] sm:$0xff]
    %v128 = vld [vmem:[#allocation7 + $0x10] sm:$0xf]
    %vm129 = vcmask 162816
    %v131 = vsel %vm129, %v125, 0
    %vm133 = vcmask 1043456
    %v135 = vsel %vm133, %v128, 0
    %137 = vmatpush.msra.mxu0 0.0
    %138 = vmatpush.msra.mxu0 0.0
    %139 = vmatpush.msra.mxu0 0.0
    %140 = vmatpush.msra.mxu0 0.0
    %141 = vmatpush.msra.mxu0 0.0
    %142 = vmatpush.msra.mxu0 0.0
    %143 = vmatpush.msra.mxu0 0.0
    %144 = vmatpush.msra.mxu0 0.0
    %145 = vmatpush.msra.mxu0 0.0
    %146 = vmatpush.msra.mxu0 0.0
    %147 = vmatpush.msra.mxu0 0.0
    %148 = vmatpush.msra.mxu0 0.0
    %149 = vmatpush.msra.mxu0 0.0
    %150 = vmatpush.msra.mxu0 %v135
    %151 = vmatpush.msra.mxu0 %v127
    %152 = vmatpush.msra.mxu0 %v126
    %153 = vmatmul.f32.gmra.mxu0 %v131
    %v154 = vpop.f32.mrf.mxu0
    %v155 = vadd.f32 0.0, %v154
    %156 = vdwg.mxu0
    %vm157 = vcmask 97280
    %v159 = vsel %vm157, %v122, 0
    %v162 = vsel %vm133, %v124, 0
    %164 = vmatpush.msra.mxu0 0.0
    %165 = vmatpush.msra.mxu0 0.0
    %166 = vmatpush.msra.mxu0 0.0
    %167 = vmatpush.msra.mxu0 0.0
    %168 = vmatpush.msra.mxu0 0.0
    %169 = vmatpush.msra.mxu0 0.0
    %170 = vmatpush.msra.mxu0 0.0
    %171 = vmatpush.msra.mxu0 0.0
    %172 = vmatpush.msra.mxu0 0.0
    %173 = vmatpush.msra.mxu0 0.0
    %174 = vmatpush.msra.mxu0 0.0
    %175 = vmatpush.msra.mxu0 0.0
    %176 = vmatpush.msra.mxu0 0.0
    %177 = vmatpush.msra.mxu0 0.0
    %178 = vmatpush.msra.mxu0 %v162
    %179 = vmatpush.msra.mxu0 %v123
    %180 = vmatmul.f32.gmra.mxu0 %v159
    %v181 = vpop.f32.mrf.mxu0
    %v182 = vadd.f32 %v155, %v181
    %183 = vdwg.mxu0
    %v184 = vld [vmem:[%s4] sm:$0x1]
    %v186 = vperm.slane %v184, 0
    %v188 = vadd.f32 %v182, %v186
    %v189 = vmax.f32 %v188, 0.0
    %v190 = vld [vmem:[#allocation9] sm:$0xff]
    %v191 = vld [vmem:[#allocation9 + $0x8] sm:$0xff]
    %v192 = vld [vmem:[#allocation9 + $0x10] sm:$0xff]
    %v193 = vld [vmem:[#allocation9 + $0x18] sm:$0xff]
    %v194 = vld [vmem:[%s6] sm:$0x1]
    %v196 = vperm.slane %v194, 0
    %vm198 = vcmask 261120
    %v200 = vsel %vm198, %v189, 0
    %202 = vmatpush.msra.mxu0 0.0
    %203 = vmatpush.msra.mxu0 0.0
    %204 = vmatpush.msra.mxu0 0.0
    %205 = vmatpush.msra.mxu0 0.0
    %206 = vmatpush.msra.mxu0 0.0
    %207 = vmatpush.msra.mxu0 0.0
    %208 = vmatpush.msra.mxu0 0.0
    %209 = vmatpush.msra.mxu0 0.0
    %210 = vmatpush.msra.mxu0 0.0
    %211 = vmatpush.msra.mxu0 0.0
    %212 = vmatpush.msra.mxu0 0.0
    %213 = vmatpush.msra.mxu0 0.0
    %214 = vmatpush.msra.mxu0 %v193
    %215 = vmatpush.msra.mxu0 %v192
    %216 = vmatpush.msra.mxu0 %v191
    %217 = vmatpush.msra.mxu0 %v190
    %218 = vmatmul.f32.gmra.mxu0 %v200
    %v219 = vpop.f32.mrf.mxu0
    %v220 = vadd.f32 %v196, %v219
    %221 = vdwg.mxu0
    %v222 = vmax.f32 %v220, 0.0
    %v223 = vld [vmem:[#allocation10] sm:$0xff]
    %v224 = vld [vmem:[#allocation10 + $0x8] sm:$0xff]
    %v225 = vld [vmem:[#allocation10 + $0x10] sm:$0xff]
    %v226 = vld [vmem:[#allocation10 + $0x18] sm:$0xff]
    %v227 = vld [vmem:[%s8] sm:$0x1]
    %v229 = vperm.slane %v227, 0
    %v232 = vsel %vm198, %v222, 0
    %234 = vmatpush.msra.mxu0 0.0
    %235 = vmatpush.msra.mxu0 0.0
    %236 = vmatpush.msra.mxu0 0.0
    %237 = vmatpush.msra.mxu0 0.0
    %238 = vmatpush.msra.mxu0 0.0
    %239 = vmatpush.msra.mxu0 0.0
    %240 = vmatpush.msra.mxu0 0.0
    %241 = vmatpush.msra.mxu0 0.0
    %242 = vmatpush.msra.mxu0 0.0
    %243 = vmatpush.msra.mxu0 0.0
    %244 = vmatpush.msra.mxu0 0.0
    %245 = vmatpush.msra.mxu0 0.0
    %246 = vmatpush.msra.mxu0 %v226
    %247 = vmatpush.msra.mxu0 %v225
    %248 = vmatpush.msra.mxu0 %v224
    %249 = vmatpush.msra.mxu0 %v223
    %250 = vmatmul.f32.gmra.mxu0 %v232
    %v251 = vpop.f32.mrf.mxu0
    %v252 = vadd.f32 %v229, %v251
    %253 = vdwg.mxu0
    %254 = vst [vmem:[%s9] sm:$0xff] %v252
    // Predicated region
    $region62: #{forward.1} parent=1 // pred_check
      _
    $region63: #{forward.1} parent=1 // pred_check_branch
      %256 = sbr.rel (0) target = $region65
    $region64: #{forward.1} parent=1 // pred_region
      _
    $region65: #{forward.1} parent=1 // pred_fallthru
      _
    // Predicated region
    $region66: #{forward.1} parent=1 // pred_check
      _
    $region67: #{forward.1} parent=1 // pred_check_branch
      %258 = sbr.rel (0) target = $region69
    $region68: #{forward.1} parent=1 // pred_region
      _
    $region69: #{forward.1} parent=1 // pred_fallthru
      _
    %259 = vsyncpa [#allocation3], 1
    %260 = vsyncpa [#allocation5], 1
    %261 = vsyncpa [#allocation8], 1
    %262 = vsyncpa [#allocation11], 1

</llo_original>
